<compile_context>
chip_gen: v5e
topology: v5e:2x2
jax: 0.10.0
libtpu: 0.0.40
codegen_flags: <defaults>
</compile_context>

<pallas_src>
import functools

import jax
import jax.numpy as jnp
from jax import lax
from jax.experimental import pallas as pl
from jax.experimental.pallas import tpu as pltpu


def _style_loss_kernel(x_ref, t_ref, o_ref, gram_acc, *,
                       inv_hw, hw, tk, mask_tail, compute_dtype):
    k = pl.program_id(1)
    nk = pl.num_programs(1)

    @pl.when(k == 0)
    def _():
        gram_acc[...] = jnp.zeros_like(gram_acc)

    f = x_ref[0]                                        # (C, TK)

    if mask_tail:
        # Ragged last tile: zero out lanes past the true HW extent (the
        # out-of-bounds region of a partial block is undefined). Cheap VPU
        # iota/compare/select; avoids a padded HBM copy of x.
        col = k * tk + lax.broadcasted_iota(jnp.int32, f.shape, 1)
        f = jnp.where(col < hw, f, jnp.zeros_like(f))

    if compute_dtype is not None:
        # In-kernel cast (e.g. bf16) feeds the bf16-native MXU without an
        # extra HBM round trip; the accumulator stays f32.
        f = f.astype(compute_dtype)

    # Transpose-free Gram contribution: contract both operands on the lane dim.
    gram_acc[...] += lax.dot_general(
        f, f,
        dimension_numbers=(((1,), (1,)), ((), ())),
        preferred_element_type=jnp.float32,
    )

    @pl.when(k == nk - 1)
    def _():
        # Finalize once per batch element: scale, diff vs. target, reduce.
        diff = gram_acc[...] * inv_hw - t_ref[0]        # (C, C)
        partial = jnp.sum(diff * diff)
        # Lane-dense, (8,128)-conformant store of the per-batch partial sum.
        o_ref[...] = jnp.full(o_ref.shape, partial, dtype=o_ref.dtype)


def _choose_tile(hw, c, itemsize, target_buf_bytes, vmem_budget=40 << 20):
    """Pick the HW reduction tile TK (multiple of 128, or full HW if <=128)."""
    if hw <= 128:
        return hw                                       # full-extent block

    # Keep 2x x-buffers + 2x target + (C,C) scratch inside the VMEM budget.
    fixed = 3 * c * c * 4
    per_buf_cap = max(128 * c * itemsize, (vmem_budget - fixed) // 2)
    buf_bytes = min(target_buf_bytes, per_buf_cap)

    max_tk = (buf_bytes // max(c * itemsize, 1)) // 128 * 128
    max_tk = max(128, max_tk)
    hw_ceil = -(-hw // 128) * 128
    max_tk = min(max_tk, hw_ceil)

    # Prefer a tile that divides HW exactly (no ragged tail / no masking),
    # as long as it is not much smaller than the budgeted tile.
    best_div = 0
    tk = max_tk
    while tk >= 128:
        if hw % tk == 0:
            best_div = tk
            break
        tk -= 128
    if best_div >= max_tk // 2:
        return best_div
    return max_tk


def style_loss(x, target, weight, *,
               compute_dtype=jnp.bfloat16, target_buf_bytes=8 << 20):
    """x: (B, C, H, W) float; target: (B, C, C) float (already a Gram matrix).

    compute_dtype: dtype the feature tile is cast to *inside* the kernel right
    before the MXU dot (default bf16). Pass None for exact f32 compute.
    """
    B, C, H, W = x.shape
    HW = H * W
    x_flat = x.reshape(B, C, HW)
    target = target.astype(jnp.float32)
    itemsize = jnp.dtype(x_flat.dtype).itemsize

    TK = _choose_tile(HW, C, itemsize, target_buf_bytes)
    n_k = (HW + TK - 1) // TK
    mask_tail = (HW % TK) != 0

    kernel = functools.partial(
        _style_loss_kernel,
        inv_hw=1.0 / float(HW), hw=HW, tk=TK,
        mask_tail=mask_tail, compute_dtype=compute_dtype,
    )

    # VMEM: 2x double-buffered x tile + 2x target + (C,C) scratch + out blocks.
    vmem_need = 2 * C * TK * itemsize + 3 * C * C * 4 + 2 * 8 * 128 * 4
    vmem_limit = int(min(48 << 20, max(32 << 20, int(vmem_need * 1.25) + (4 << 20))))

    cost = pl.CostEstimate(
        flops=2 * B * C * C * HW,
        transcendentals=0,
        bytes_accessed=B * C * HW * itemsize + B * C * C * 4 + B * 8 * 128 * 4,
    )

    partials = pl.pallas_call(
        kernel,
        out_shape=jax.ShapeDtypeStruct((B, 8, 128), jnp.float32),
        grid_spec=pltpu.PrefetchScalarGridSpec(
            num_scalar_prefetch=0,
            grid=(B, n_k),
            in_specs=[
                pl.BlockSpec((1, C, TK), lambda b, k: (b, 0, k)),
                pl.BlockSpec((1, C, C), lambda b, k: (b, 0, 0)),
            ],
            out_specs=pl.BlockSpec((1, 8, 128), lambda b, k: (b, 0, 0)),
            scratch_shapes=[pltpu.VMEM((C, C), jnp.float32)],
        ),
        compiler_params=pltpu.CompilerParams(
            dimension_semantics=("parallel", "arbitrary"),
            vmem_limit_bytes=vmem_limit,
        ),
        cost_estimate=cost,
    )(x_flat, target)

    sq_err_sum = jnp.sum(partials[:, 0, 0])
    # MSELoss (reduction='mean') divides by total element count B*C*C.
    return weight * sq_err_sum / (B * C * C)


def _reference(x, target, weight):
    B, C, H, W = x.shape
    f = x.reshape(B, C, H * W)
    gram = jnp.einsum("bci,bdi->bcd", f, f) / (H * W)
    return weight * jnp.mean((gram - target) ** 2)


if __name__ == "__main__":
    key = jax.random.PRNGKey(0)
    k1, k2 = jax.random.split(key)

    B, C, H, W = 2, 4, 16, 16
    weight = 1000.0

    # Features of an arbitrary cnn layer (the "pastiche" features).
    x = jax.random.normal(k1, (B, C, H, W), dtype=jnp.float32)

    # Target: Gram matrix of synthetic style features at the same layer.
    style_feats = jax.random.normal(k2, (B, C, H, W), dtype=jnp.float32)
    sf = style_feats.reshape(B, C, H * W)
    target = jnp.einsum("bci,bdi->bcd", sf, sf) / (H * W)      # (B, C, C)

    ref = _reference(x, target, weight)

    # Exact f32 path: tight tolerance.
    out_f32 = jax.block_until_ready(style_loss(x, target, weight, compute_dtype=None))
    assert jnp.allclose(out_f32, ref, rtol=1e-4, atol=1e-4), (out_f32, ref)

    # Default in-kernel bf16 MXU path: bf16-rounded features -> looser tolerance.
    out_bf16 = jax.block_until_ready(style_loss(x, target, weight))
    assert jnp.allclose(out_bf16, ref, rtol=1e-1, atol=1e-1), (out_bf16, ref)

    # Ragged-HW path: HW=400 with TK forced to 128 exercises the in-kernel
    # masked tail (no padded copy of x in HBM), multi-step reduction.
    H2, W2 = 20, 20
    x2 = jax.random.normal(k1, (B, C, H2, W2), dtype=jnp.float32)
    sf2 = jax.random.normal(k2, (B, C, H2, W2), dtype=jnp.float32).reshape(B, C, H2 * W2)
    t2 = jnp.einsum("bci,bdi->bcd", sf2, sf2) / (H2 * W2)
    ref2 = _reference(x2, t2, weight)
    out2 = jax.block_until_ready(
        style_loss(x2, t2, weight, compute_dtype=None, target_buf_bytes=128 * C * 4))
    assert jnp.allclose(out2, ref2, rtol=1e-4, atol=1e-4), (out2, ref2)

    print("KERNEL_OK")
</pallas_src>

<mosaic_0001>
module attributes {stable_mosaic.version = 11 : i64} {
  func.func @_style_loss_kernel(%arg0: i32, %arg1: i32, %arg2: memref<1x4x256xf32, #tpu.memory_space<vmem>>, %arg3: memref<1x4x4xf32, #tpu.memory_space<vmem>>, %arg4: memref<1x8x128xf32, #tpu.memory_space<vmem>>, %arg5: memref<4x4xf32, #tpu.memory_space<vmem>>) attributes {dimension_semantics = [#tpu.dimension_semantics<parallel>, #tpu.dimension_semantics<arbitrary>], iteration_bounds = array<i64: 2, 1>, scalar_prefetch = 0 : i64, scratch_operands = 1 : i64, tpu.core_type = #tpu.core_type<tc>, window_params = [{transform_indices = @transform_0, window_bounds = array<i64: 1, 4, 256>}, {transform_indices = @transform_1, window_bounds = array<i64: 1, 4, 4>}, {transform_indices = @transform_2, window_bounds = array<i64: 1, 8, 128>}]} {
    %c0_i32 = arith.constant 0 : i32
    %0 = arith.cmpi eq, %arg1, %c0_i32 : i32
    %1 = arith.extui %0 : i1 to i32
    %c0_i32_0 = arith.constant 0 : i32
    %2 = arith.cmpi ne, %1, %c0_i32_0 : i32
    scf.if %2 {
      %cst_9 = arith.constant 0.000000e+00 : f32
      %12 = vector.broadcast %cst_9 : f32 to vector<4x4xf32>
      %c0_10 = arith.constant 0 : index
      %c0_11 = arith.constant 0 : index
      %13 = vector.load %arg5[%c0_10, %c0_11] : memref<4x4xf32, #tpu.memory_space<vmem>>, vector<4x4xf32>
      tpu.vector_store %arg5[%c0_10, %c0_11], %12 {strides = array<i32>} : memref<4x4xf32, #tpu.memory_space<vmem>>, vector<4x4xf32>,
    } else {
    }
    %c0 = arith.constant 0 : index
    %c0_1 = arith.constant 0 : index
    %c0_2 = arith.constant 0 : index
    %3 = vector.load %arg2[%c0, %c0_1, %c0_2] : memref<1x4x256xf32, #tpu.memory_space<vmem>>, vector<1x4x256xf32>
    %4 = vector.shape_cast %3 : vector<1x4x256xf32> to vector<4x256xf32>
    %c0_3 = arith.constant 0 : index
    %c0_4 = arith.constant 0 : index
    %5 = vector.load %arg5[%c0_3, %c0_4] : memref<4x4xf32, #tpu.memory_space<vmem>>, vector<4x4xf32>
    %cst = arith.constant dense<0.000000e+00> : vector<4x4xf32>
    %6 = tpu.matmul %4, %4, %cst {dimension_numbers = #tpu.dot_dimension_numbers<[1], [1], [0], [0], [0, 0, 1, 0], [], []>} : vector<4x256xf32>, vector<4x256xf32>, vector<4x4xf32> -> vector<4x4xf32>
    %7 = arith.addf %5, %6 : vector<4x4xf32>
    %c0_5 = arith.constant 0 : index
    %c0_6 = arith.constant 0 : index
    %8 = vector.load %arg5[%c0_5, %c0_6] : memref<4x4xf32, #tpu.memory_space<vmem>>, vector<4x4xf32>
    tpu.vector_store %arg5[%c0_5, %c0_6], %7 {strides = array<i32>} : memref<4x4xf32, #tpu.memory_space<vmem>>, vector<4x4xf32>,
    %c0_i32_7 = arith.constant 0 : i32
    %9 = arith.cmpi eq, %arg1, %c0_i32_7 : i32
    %10 = arith.extui %9 : i1 to i32
    %c0_i32_8 = arith.constant 0 : i32
    %11 = arith.cmpi ne, %10, %c0_i32_8 : i32
    scf.if %11 {
      %c0_9 = arith.constant 0 : index
      %c0_10 = arith.constant 0 : index
      %12 = vector.load %arg5[%c0_9, %c0_10] : memref<4x4xf32, #tpu.memory_space<vmem>>, vector<4x4xf32>
      %cst_11 = arith.constant 3.906250e-03 : f32
      %13 = vector.broadcast %cst_11 : f32 to vector<4x4xf32>
      %14 = arith.mulf %12, %13 : vector<4x4xf32>
      %c0_12 = arith.constant 0 : index
      %c0_13 = arith.constant 0 : index
      %c0_14 = arith.constant 0 : index
      %15 = vector.load %arg3[%c0_12, %c0_13, %c0_14] : memref<1x4x4xf32, #tpu.memory_space<vmem>>, vector<1x4x4xf32>
      %16 = vector.shape_cast %15 : vector<1x4x4xf32> to vector<4x4xf32>
      %17 = arith.subf %14, %16 : vector<4x4xf32>
      %18 = arith.mulf %17, %17 : vector<4x4xf32>
      %19 = vector.shape_cast %18 : vector<4x4xf32> to vector<1x4x4xf32>
      %cst_15 = arith.constant dense<0.000000e+00> : vector<1xf32>
      %20 = vector.multi_reduction <add>, %19, %cst_15 [1, 2] : vector<1x4x4xf32> to vector<1xf32>
      %21 = vector.shape_cast %20 : vector<1xf32> to vector<1x1x1xf32>
      %22 = vector.extract %21[0, 0, 0] : f32 from vector<1x1x1xf32>
      %23 = vector.broadcast %22 : f32 to vector<1x8x128xf32>
      %c0_16 = arith.constant 0 : index
      %c0_17 = arith.constant 0 : index
      %c0_18 = arith.constant 0 : index
      %24 = vector.load %arg4[%c0_16, %c0_17, %c0_18] : memref<1x8x128xf32, #tpu.memory_space<vmem>>, vector<1x8x128xf32>
      tpu.vector_store %arg4[%c0_16, %c0_17, %c0_18], %23 {strides = array<i32>} : memref<1x8x128xf32, #tpu.memory_space<vmem>>, vector<1x8x128xf32>,
    } else {
    }
    return
  }
  func.func @transform_0(%arg0: i32, %arg1: i32) -> (i32, i32, i32) {
    %c0_i32 = arith.constant 0 : i32
    %c0_i32_0 = arith.constant 0 : i32
    return %arg0, %c0_i32, %arg1 : i32, i32, i32
  }
  func.func @transform_1(%arg0: i32, %arg1: i32) -> (i32, i32, i32) {
    %c0_i32 = arith.constant 0 : i32
    %c0_i32_0 = arith.constant 0 : i32
    %c0_i32_1 = arith.constant 0 : i32
    return %arg0, %c0_i32, %c0_i32_0 : i32, i32, i32
  }
  func.func @transform_2(%arg0: i32, %arg1: i32) -> (i32, i32, i32) {
    %c0_i32 = arith.constant 0 : i32
    %c0_i32_0 = arith.constant 0 : i32
    %c0_i32_1 = arith.constant 0 : i32
    return %arg0, %c0_i32, %c0_i32_0 : i32, i32, i32
  }
}

</mosaic_0001>

<llo_original>
// kernel: tpu_custom_call.1
$region0: #{tpu_custom_call.1}
  #allocation0 [shape = 'u32[]', space=smem, size = 0x4, offset = 0x4, fixed_abs, tag = 'smem constant byte address 0x4 - core index']
  #allocation1 [shape = 'u32[72,128]{1,0:T(1,128)}', space=vmem, size = 0x9000, scoped, tag = 'internal scratch']
  #allocation2 [shape = 'f32[4,4]{1,0:T(4,128)}', space=vmem, size = 0x800, scoped, tag = 'scratch operand']
  %s0 = inlined_call_operand.hbm [shape: f32[2,4,256], index: 0, kind: input, shape index: {}]
  %s1 = inlined_call_operand.hbm [shape: f32[2,4,4], index: 1, kind: input, shape index: {}]
  %s2 = inlined_call_operand.hbm [shape: f32[2,8,128], index: 2, kind: output, shape index: {}]
  %s3 = sld [smem:[#allocation0]]
  $region57: #{tpu_custom_call.1} parent=0
    _
  %s5 = ssub.s32 1, %s3
  %s6 = scalar_select 0, %s5, %s3
  $region1: #{tpu_custom_call.1} parent=0
    #allocation3 [shape = 'u8[8192]{0}', space=vmem, size = 0x2000, scoped, tag = 'input window, operand 0']
    #allocation4 [shape = 's32[2]{0}', space=sflag, size = 0x8, scoped, tag = 'scoped memory for tpu_custom_call.1']
    #allocation5 [shape = 's32[2]{0}', space=sflag, size = 0x8, scoped, tag = 'scoped memory for tpu_custom_call.1']
    #allocation6 [shape = 'u8[4096]{0}', space=vmem, size = 0x1000, scoped, tag = 'input window, operand 1']
    #allocation7 [shape = 's32[2]{0}', space=sflag, size = 0x8, scoped, tag = 'scoped memory for tpu_custom_call.1']
    #allocation8 [shape = 'u8[8192]{0}', space=vmem, size = 0x2000, scoped, tag = 'output window, operand 0']
    %7 = vsyncpa [#allocation4], 0
    %s8 = scalar_lea.sflag [#allocation4], 1
    %9 = vsyncpa %s8, 0
    %10 = vsyncpa [#allocation7], 0
    %s11 = scalar_lea.sflag [#allocation7], 1
    %12 = vsyncpa %s11, 0
    %13 = vsyncpa [#allocation5], 0
    %s14 = scalar_lea.sflag [#allocation5], 1
    %15 = vsyncpa %s14, 0
    loop: start=0, step=1, limit=4
    $region2: #{tpu_custom_call.1} parent=1 // loop_pre_header
      _
    $region3: #{tpu_custom_call.1} parent=1 // loop_header
      %s17 = sphi 0, %s21
      %p18 = scmp.ge.s32.totalorder %s17, 4
      %s24 = sphi 0, %s36
      %s25 = sphi 0, %s32
      %s26 = sphi 0, %s24
      %s27 = sphi 0, %s25
      %s28 = sphi 0, %s26
      %s29 = sphi 0, %s27
      %s41 = sphi 0, %s43
      %s44 = sphi 0, %s41
      %s45 = sphi 0, %s44
      %s61 = sphi 0, %s45
      %s67 = sphi 0, %s69
      %s70 = sphi 0, %s67
      %s71 = sphi 0, %s70
      %s87 = sphi 0, %s71
      %s93 = sphi 0, %s95
      %s96 = sphi 0, %s93
      %s97 = sphi 0, %s96
      %s113 = sphi 0, %s97
    $region4: #{tpu_custom_call.1} parent=1 // loop_header_branch
      %20 = sbr.rel (%p18) target = $region8
    $region5: #{tpu_custom_call.1} parent=1 // loop_body
      %s22 = ssub.s32 %s17, 1
      %s23 = ssub.s32 %s17, 2
      %s30 = sadd.s32 1, %s25
      %p31 = scmp.ge.s32.totalorder %s30, 1
      %s32 = scalar_select %p31, 0, %s30
      %s33 = sadd.s32 1, %s24
      %s34 = scalar_select %p31, %s33, %s24
      %p35 = scmp.ge.s32.totalorder %s34, 2
      %s36 = scalar_select %p35, 0, %s34
      %s37 = ssub.s32 %s24, %s36
      %s38 = ssub.s32 %s25, %s32
      %s39 = sor.u32 %s37, %s38
      %p40 = scmp.eq.s32.totalorder %s39, 0
      %s42 = sadd.s32 %s41, 1
      %s43 = scalar_select %p40, %s41, %s42
      %p46 = pneg %p40
      %p47 = scmp.eq.s32.totalorder %s17, 1
      %p48 = por %p46, %p47
      %p49 = scmp.ne.s32.totalorder %s41, %s44
      %p50 = scmp.eq.s32.totalorder %s17, 0
      %p51 = por %p49, %p50
      %p52 = scmp.ne.s32.totalorder %s41, %s44
      %p53 = scmp.eq.s32.totalorder %s22, 1
      %p54 = por %p52, %p53
      %p55 = scmp.ne.s32.totalorder %s44, %s45
      %p56 = scmp.eq.s32.totalorder %s22, 0
      %p57 = por %p55, %p56
      %p58 = scmp.ne.s32.totalorder %s44, %s45
      %p59 = scmp.eq.s32.totalorder %s23, 1
      %p60 = por %p58, %p59
      %p62 = scmp.ne.s32.totalorder %s45, %s61
      %p63 = scmp.eq.s32.totalorder %s23, 0
      %p64 = por %p62, %p63
      %s65 = ssub.s32 %s24, %s36
      %p66 = scmp.eq.s32.totalorder %s65, 0
      %s68 = sadd.s32 %s67, 1
      %s69 = scalar_select %p66, %s67, %s68
      %p72 = pneg %p66
      %p73 = scmp.eq.s32.totalorder %s17, 1
      %p74 = por %p72, %p73
      %p75 = scmp.ne.s32.totalorder %s67, %s70
      %p76 = scmp.eq.s32.totalorder %s17, 0
      %p77 = por %p75, %p76
      %p78 = scmp.ne.s32.totalorder %s67, %s70
      %p79 = scmp.eq.s32.totalorder %s22, 1
      %p80 = por %p78, %p79
      %p81 = scmp.ne.s32.totalorder %s70, %s71
      %p82 = scmp.eq.s32.totalorder %s22, 0
      %p83 = por %p81, %p82
      %p84 = scmp.ne.s32.totalorder %s70, %s71
      %p85 = scmp.eq.s32.totalorder %s23, 1
      %p86 = por %p84, %p85
      %p88 = scmp.ne.s32.totalorder %s71, %s87
      %p89 = scmp.eq.s32.totalorder %s23, 0
      %p90 = por %p88, %p89
      %s91 = ssub.s32 %s24, %s36
      %p92 = scmp.eq.s32.totalorder %s91, 0
      %s94 = sadd.s32 %s93, 1
      %s95 = scalar_select %p92, %s93, %s94
      %p98 = pneg %p92
      %p99 = scmp.eq.s32.totalorder %s17, 1
      %p100 = por %p98, %p99
      %p101 = scmp.ne.s32.totalorder %s93, %s96
      %p102 = scmp.eq.s32.totalorder %s17, 0
      %p103 = por %p101, %p102
      %p104 = scmp.ne.s32.totalorder %s93, %s96
      %p105 = scmp.eq.s32.totalorder %s22, 1
      %p106 = por %p104, %p105
      %p107 = scmp.ne.s32.totalorder %s96, %s97
      %p108 = scmp.eq.s32.totalorder %s22, 0
      %p109 = por %p107, %p108
      %p110 = scmp.ne.s32.totalorder %s96, %s97
      %p111 = scmp.eq.s32.totalorder %s23, 1
      %p112 = por %p110, %p111
      %p114 = scmp.ne.s32.totalorder %s97, %s113
      %p115 = scmp.eq.s32.totalorder %s23, 0
      %p116 = por %p114, %p115
      %p117 = scmp.le.s32.totalorder 1, %s17
      %p118 = scmp.lt.s32.totalorder %s17, 3
      %p119 = pnand %p117, %p118
      %p120 = pneg %p119
      // Predicated region
      $region9: #{tpu_custom_call.1} parent=5 // pred_check
        _
      $region10: #{tpu_custom_call.1} parent=5 // pred_check_branch
        %122 = sbr.rel (%p119) target = $region12
      $region11: #{tpu_custom_call.1} parent=5 // pred_region
        %s123 = ssub.s32 %s17, 1
      $region12: #{tpu_custom_call.1} parent=5 // pred_fallthru
        _
      %p124 = scmp.lt.s32.totalorder %s17, 2
      // Predicated region
      $region13: #{tpu_custom_call.1} parent=5 // pred_check
        %p125 = pneg %p124
      $region14: #{tpu_custom_call.1} parent=5 // pred_check_branch
        %127 = sbr.rel (%p125) target = $region16
      $region15: #{tpu_custom_call.1} parent=5 // pred_region
        // Predicated region
        $region17: #{tpu_custom_call.1} parent=15 // pred_check
          %p128 = pneg %p51
        $region18: #{tpu_custom_call.1} parent=15 // pred_check_branch
          %130 = sbr.rel (%p128) target = $region20
        $region19: #{tpu_custom_call.1} parent=15 // pred_region
          %s131 = sand.u32 %s41, 1
          %s132 = scalar_lea.sflag [#allocation4], %s131
          %s133 = sand.u32 %s41, 1
          %s134 = smul.addr %s133, 8
          %s135 = scalar_lea.vmem [#allocation3], %s134
          %s136 = smul.u32 2, %s25
          %138 = vsyncadd %s132, 0
          %s139 = smul.addr %s24, 2
          %s140 = sadd.s32 %s136, %s139
          %s141 = smul.addr %s140, 4
          %s142 = scalar_lea.hbm %s0, %s141
          %s144 = sshll.u32 %s142, 4
          %s145 = int_to_ptr.hbm [resolvable:$true] %s144
          %s146 = sshll.u32 %s135, 4
          %s147 = int_to_ptr.vmem [resolvable:$true] %s146
          %149 = dma.hbm_to_vmem [thread:$0]  %s145, 128, %s147, %s132
        $region20: #{tpu_custom_call.1} parent=15 // pred_fallthru
          _
        // Predicated region
        $region21: #{tpu_custom_call.1} parent=15 // pred_check
          %p150 = pneg %p77
        $region22: #{tpu_custom_call.1} parent=15 // pred_check_branch
          %152 = sbr.rel (%p150) target = $region24
        $region23: #{tpu_custom_call.1} parent=15 // pred_region
          %s153 = sand.u32 %s67, 1
          %s154 = scalar_lea.sflag [#allocation7], %s153
          %s155 = sand.u32 %s67, 1
          %s156 = smul.addr %s155, 4
          %s157 = scalar_lea.vmem [#allocation6], %s156
          %159 = vsyncadd %s154, 0
          %s160 = smul.addr %s24, 4
          %s161 = scalar_lea.hbm %s1, %s160
          %s163 = sshll.u32 %s161, 4
          %s164 = int_to_ptr.hbm [resolvable:$true] %s163
          %s165 = sshll.u32 %s157, 4
          %s166 = int_to_ptr.vmem [resolvable:$true] %s165
          %168 = dma.hbm_to_vmem [thread:$0]  %s164, 64, %s166, %s154
        $region24: #{tpu_custom_call.1} parent=15 // pred_fallthru
          _
      $region16: #{tpu_custom_call.1} parent=5 // pred_fallthru
        _
      %p169 = scmp.le.s32.totalorder 1, %s17
      %p170 = scmp.lt.s32.totalorder %s17, 3
      %p171 = pnand %p169, %p170
      %p172 = pneg %p171
      // Predicated region
      $region25: #{tpu_custom_call.1} parent=5 // pred_check
        _
      $region26: #{tpu_custom_call.1} parent=5 // pred_check_branch
        %174 = sbr.rel (%p171) target = $region28
      $region27: #{tpu_custom_call.1} parent=5 // pred_region
        %s175 = ssub.s32 %s17, 1
        %s176 = sand.u32 %s44, 1
        %s177 = scalar_lea.sflag [#allocation4], %s176
        %s178 = sand.u32 %s44, 1
        %s179 = smul.addr %s178, 8
        %s180 = scalar_lea.vmem [#allocation3], %s179
        // Predicated region
        $region29: #{tpu_custom_call.1} parent=27 // pred_check
          %p181 = pneg %p57
        $region30: #{tpu_custom_call.1} parent=27 // pred_check_branch
          %183 = sbr.rel (%p181) target = $region32
        $region31: #{tpu_custom_call.1} parent=27 // pred_region
          %185 = dma.done %s177, 128
        $region32: #{tpu_custom_call.1} parent=27 // pred_fallthru
          _
        %s186 = sand.u32 %s70, 1
        %s187 = scalar_lea.sflag [#allocation7], %s186
        %s188 = sand.u32 %s70, 1
        %s189 = smul.addr %s188, 4
        %s190 = scalar_lea.vmem [#allocation6], %s189
        // Predicated region
        $region33: #{tpu_custom_call.1} parent=27 // pred_check
          %p191 = pneg %p83
        $region34: #{tpu_custom_call.1} parent=27 // pred_check_branch
          %193 = sbr.rel (%p191) target = $region36
        $region35: #{tpu_custom_call.1} parent=27 // pred_region
          %195 = dma.done %s187, 64
        $region36: #{tpu_custom_call.1} parent=27 // pred_fallthru
          _
        %s196 = sand.u32 %s44, 1
        %s197 = scalar_lea.sflag [#allocation4], %s196
        %s198 = sand.u32 %s44, 1
        %s199 = smul.addr %s198, 8
        %s200 = scalar_lea.vmem [#allocation3], %s199
        %p201 = pneg %p57
        %p202 = pneg %p54
        %s203 = sand.u32 %s70, 1
        %s204 = scalar_lea.sflag [#allocation7], %s203
        %s205 = sand.u32 %s70, 1
        %s206 = smul.addr %s205, 4
        %s207 = scalar_lea.vmem [#allocation6], %s206
        %p208 = pneg %p83
        %p209 = pneg %p80
        %p210 = pneg %p109
        %p211 = pneg %p106
        %s212 = sand.u32 %s96, 1
        %s213 = scalar_lea.sflag [#allocation5], %s212
        %s214 = sand.u32 %s96, 1
        %s215 = smul.addr %s214, 8
        %s216 = scalar_lea.vmem [#allocation8], %s215
        %s217 = smul.u32 2, %s27
        %p218 = scmp.eq.s32.totalorder %s27, 0
        // Predicated region
        $region37: #{tpu_custom_call.1} parent=27 // pred_check
          %p219 = pneg %p218
        $region38: #{tpu_custom_call.1} parent=27 // pred_check_branch
          %221 = sbr.rel (%p219) target = $region40
        $region39: #{tpu_custom_call.1} parent=27 // pred_region
          %vm222 = vcmask 27648
          %223 = vst.msk [vmem:[#allocation2] sm:$0xf] %vm222, 0.0
        $region40: #{tpu_custom_call.1} parent=27 // pred_fallthru
          _
        %v224 = vld [vmem:[%s180] sm:$0xff]
        %v225 = vld [vmem:[#allocation2] sm:$0xf]
        %227 = vst [vmem:[#allocation1] ss:$2 sm:$0xff] %v224
        %v228 = vld.sshfl [vmem:[#allocation1] sm:$0xff pattern:$0x75316420]
        %v229 = vld.sshfl [vmem:[#allocation1 + $0x8] sm:$0xff pattern:$0x75316420]
        %232 = vst [vmem:[#allocation1] ss:$2 sm:$0xff] %v224
        %v233 = vld.sshfl [vmem:[#allocation1] sm:$0xff pattern:$0x75316420]
        %v234 = vld.sshfl [vmem:[#allocation1 + $0x8] sm:$0xff pattern:$0x75316420]
        %237 = vmatpush.xpose.msra.mxu0 0.0
        %238 = vmatpush.xpose.msra.mxu0 0.0
        %239 = vmatpush.xpose.msra.mxu0 0.0
        %240 = vmatpush.xpose.msra.mxu0 0.0
        %241 = vmatpush.xpose.msra.mxu0 0.0
        %242 = vmatpush.xpose.msra.mxu0 0.0
        %243 = vmatpush.xpose.msra.mxu0 0.0
        %244 = vmatpush.xpose.msra.mxu0 0.0
        %245 = vmatpush.xpose.msra.mxu0 0.0
        %246 = vmatpush.xpose.msra.mxu0 0.0
        %247 = vmatpush.xpose.msra.mxu0 0.0
        %248 = vmatpush.xpose.msra.mxu0 0.0
        %249 = vmatpush.xpose.msra.mxu0 0.0
        %250 = vmatpush.xpose.msra.mxu0 0.0
        %251 = vmatpush.xpose.msra.mxu0 0.0
        %252 = vmatpush.xpose.msra.mxu0 %v233
        %253 = vmatmul.f32.gmra.mxu0 %v228
        %v254 = vpop.f32.mrf.mxu0
        %v255 = vadd.f32 0.0, %v254
        %256 = vdwg.mxu0
        %257 = vmatpush.xpose.msra.mxu0 0.0
        %258 = vmatpush.xpose.msra.mxu0 0.0
        %259 = vmatpush.xpose.msra.mxu0 0.0
        %260 = vmatpush.xpose.msra.mxu0 0.0
        %261 = vmatpush.xpose.msra.mxu0 0.0
        %262 = vmatpush.xpose.msra.mxu0 0.0
        %263 = vmatpush.xpose.msra.mxu0 0.0
        %264 = vmatpush.xpose.msra.mxu0 0.0
        %265 = vmatpush.xpose.msra.mxu0 0.0
        %266 = vmatpush.xpose.msra.mxu0 0.0
        %267 = vmatpush.xpose.msra.mxu0 0.0
        %268 = vmatpush.xpose.msra.mxu0 0.0
        %269 = vmatpush.xpose.msra.mxu0 0.0
        %270 = vmatpush.xpose.msra.mxu0 0.0
        %271 = vmatpush.xpose.msra.mxu0 0.0
        %272 = vmatpush.xpose.msra.mxu0 %v234
        %273 = vmatmul.f32.gmra.mxu0 %v229
        %v274 = vpop.f32.mrf.mxu0
        %v275 = vadd.f32 %v255, %v274
        %276 = vdwg.mxu0
        %v277 = vadd.f32 %v225, %v275
        %vm278 = vcmask 27648
        %279 = vst.msk [vmem:[#allocation2] sm:$0xf] %vm278, %v277
        // Predicated region
        $region41: #{tpu_custom_call.1} parent=27 // pred_check
          %p280 = pneg %p218
        $region42: #{tpu_custom_call.1} parent=27 // pred_check_branch
          %282 = sbr.rel (%p280) target = $region44
        $region43: #{tpu_custom_call.1} parent=27 // pred_region
          %v283 = vld [vmem:[#allocation2] sm:$0xf]
          %v284 = vmul.f32 %v283, 0.00390625
          %v285 = vld [vmem:[%s190] sm:$0xf]
          %v286 = vsub.f32 %v284, %v285
          %v287 = vmul.f32 %v286, %v286
          %v288 = vsel %vm278, %v287, 0.0
          %289 = vadd.xlane.f32.xlu0 %v288
          %v290 = vpop.xlane.xlu0 %289
          %v291 = vrot.slane %v290, 4
          %v292 = vadd.f32 %v290, %v291
          %v293 = vrot.slane %v292, 2
          %v294 = vadd.f32 %v292, %v293
          %v295 = vrot.slane %v294, 1
          %v296 = vadd.f32 %v294, %v295
          %s297 = vtos %v296
          %v298 = vstv %s297
          %299 = vst [vmem:[%s216] sm:$0xff] %v298
        $region44: #{tpu_custom_call.1} parent=27 // pred_fallthru
          _
        %s300 = sand.u32 %s96, 1
        %s301 = scalar_lea.sflag [#allocation5], %s300
        %s302 = sand.u32 %s96, 1
        %s303 = smul.addr %s302, 8
        %s304 = scalar_lea.vmem [#allocation8], %s303
        // Predicated region
        $region45: #{tpu_custom_call.1} parent=27 // pred_check
          %p305 = pneg %p106
        $region46: #{tpu_custom_call.1} parent=27 // pred_check_branch
          %307 = sbr.rel (%p305) target = $region48
        $region47: #{tpu_custom_call.1} parent=27 // pred_region
          %309 = vsyncadd %s301, 0
          %s310 = smul.addr %s26, 8
          %s311 = scalar_lea.hbm %s2, %s310
          %s313 = sshll.u32 %s304, 4
          %s314 = int_to_ptr.vmem [resolvable:$true] %s313
          %s315 = sshll.u32 %s311, 4
          %s316 = int_to_ptr.hbm [resolvable:$true] %s315
          %318 = dma.vmem_to_hbm [thread:$0]  %s314, 128, %s316, %s301
        $region48: #{tpu_custom_call.1} parent=27 // pred_fallthru
          _
      $region28: #{tpu_custom_call.1} parent=5 // pred_fallthru
        _
      %p319 = scmp.le.s32.totalorder 2, %s17
      // Predicated region
      $region49: #{tpu_custom_call.1} parent=5 // pred_check
        %p320 = pneg %p319
      $region50: #{tpu_custom_call.1} parent=5 // pred_check_branch
        %322 = sbr.rel (%p320) target = $region52
      $region51: #{tpu_custom_call.1} parent=5 // pred_region
        %s323 = ssub.s32 %s17, 2
        // Predicated region
        $region53: #{tpu_custom_call.1} parent=51 // pred_check
          %p324 = pneg %p112
        $region54: #{tpu_custom_call.1} parent=51 // pred_check_branch
          %326 = sbr.rel (%p324) target = $region56
        $region55: #{tpu_custom_call.1} parent=51 // pred_region
          %s327 = sand.u32 %s97, 1
          %s328 = scalar_lea.sflag [#allocation5], %s327
          %s329 = sand.u32 %s97, 1
          %s330 = smul.addr %s329, 8
          %s331 = scalar_lea.vmem [#allocation8], %s330
          %333 = dma.done %s328, 128
        $region56: #{tpu_custom_call.1} parent=51 // pred_fallthru
          _
      $region52: #{tpu_custom_call.1} parent=5 // pred_fallthru
        _
    $region6: #{tpu_custom_call.1} parent=1 // loop_footer
      %s21 = sadd.s32 1, %s17
    $region7: #{tpu_custom_call.1} parent=1 // loop_footer_branch
      %16 = sbr.rel target = $region3
    $region8: #{tpu_custom_call.1} parent=1 // loop_exit
      _
    %334 = vsyncpa [#allocation4], 1
    %s335 = scalar_lea.sflag [#allocation4], 1
    %336 = vsyncpa %s335, 1
    %337 = vsyncpa [#allocation7], 1
    %s338 = scalar_lea.sflag [#allocation7], 1
    %339 = vsyncpa %s338, 1
    %340 = vsyncpa [#allocation5], 1
    %s341 = scalar_lea.sflag [#allocation5], 1
    %342 = vsyncpa %s341, 1

</llo_original>
